<compile_context>
chip_gen: v7x
topology: tpu7x:2x2x1
jax: 0.10.0
libtpu: 0.0.40
codegen_flags: <defaults>
</compile_context>

<pallas_src>
import jax
import jax.numpy as jnp
from jax.experimental import pallas as pl
from jax.experimental.pallas import tpu as pltpu

K_TIME = 25     # temporal conv kernel width  (1, 25)
N_FILT = 40     # number of filters
POOL_W = 75     # AvgPool2d window (1, 75)
POOL_S = 15     # AvgPool2d stride (1, 15)
BN_EPS = 1e-5   # PyTorch BatchNorm2d default eps


# ----------------------------------------------------------------------------
# Fused kernel: im2col -> (conv1∘conv2∘BN) matmul -> square -> pool matmul
#               -> log -> Linear.  One batch block per grid step.
# ----------------------------------------------------------------------------
def _fused_kernel(x_ref, wc_ref, shift_ref, pmat_ref, wl_ref, bl_ref, out_ref):
    BB = x_ref.shape[0]
    T = x_ref.shape[2]
    T_out = T - K_TIME + 1
    n_cls = out_ref.shape[1]

    wc = wc_ref[...]                                  # (40, K*C_pad)  BN-scaled
    shift = shift_ref[...]                            # (40, 1)        conv bias + BN shift
    pmat = pmat_ref[...]                              # (T_out, P_out) pooling matrix
    wl = wl_ref[...]                                  # (n_cls, 40, P_out)
    x = x_ref[...].astype(wc.dtype)                   # (BB, C_pad, T)

    # im2col: row index = k*C_pad + c, lanes = output time.  Each piece keeps
    # channels on (8-aligned) sublanes, so the concat is tile-aligned.
    patches = jnp.concatenate(
        [x[:, :, k:k + T_out] for k in range(K_TIME)], axis=1)  # (BB, K*C_pad, T_out)

    # Per batch element: two MXU-native 2-D matmuls + cheap VPU/EUP epilogue.
    # (BB <= 8, statically unrolled; each iteration is coarse-grained work.)
    feats = []
    for b in range(BB):
        conv = jnp.dot(wc, patches[b],
                       preferred_element_type=jnp.float32)       # (40, T_out)
        y = conv + shift                                          # bias + BN folded
        pooled = jnp.dot(y * y, pmat,
                         preferred_element_type=jnp.float32)      # (40, P_out)
        feats.append(jnp.log(pooled))
    lf = jnp.stack(feats, axis=0)                                 # (BB, 40, P_out)

    # Fused Linear: logits[b, n] = sum_{f,p} lf[b,f,p] * Wl[n,f,p] + bias[n].
    # n_cls is tiny, so a per-class broadcast-mul-reduce avoids any in-kernel
    # flatten / relayout of the feature block.
    cols = []
    for n in range(n_cls):
        s = jnp.sum(lf * wl[n], axis=2)                           # (BB, 40)
        cols.append(jnp.sum(s, axis=1, keepdims=True))            # (BB, 1)
    out_ref[...] = jnp.concatenate(cols, axis=1) + bl_ref[...]    # (BB, n_cls)


# ----------------------------------------------------------------------------
# Wrapper: weight folding + layout prep + pallas_call
# ----------------------------------------------------------------------------
def renorm_maxnorm(w, maxnorm):
    """torch.renorm(w, p=2, dim=0, maxnorm) — per-output-filter L2 max-norm."""
    flat = w.reshape(w.shape[0], -1)
    norms = jnp.sqrt(jnp.sum(flat * flat, axis=1, keepdims=True))
    scale = jnp.where(norms > maxnorm, maxnorm / (norms + 1e-7), 1.0)
    return (flat * scale).reshape(w.shape)


def shallowconvnet_forward(x, params, *, matmul_dtype=jnp.float32, block_batch=8):
    """x: (B, 1, C, T) float32 -> logits (B, num_classes) float32.

    matmul_dtype=jnp.bfloat16 casts the conv matmul operands to bf16 (f32
    accumulation) for higher MXU throughput on v5e/v6e/v7x; default keeps f32.
    """
    B, _, C, T = x.shape
    T_out = T - K_TIME + 1
    assert T_out >= POOL_W, "need n_time >= 99 so at least one pooling window fits"
    P_out = (T_out - POOL_W) // POOL_S + 1
    n_cls = params["lin_b"].shape[0]

    # ---- parameter folding (tiny, done once outside the kernel) ----
    w1 = renorm_maxnorm(params["conv1_w"], 2.0)[:, 0, 0, :]          # (40, 25)
    w2 = renorm_maxnorm(params["conv2_w"], 2.0)[:, :, :, 0]          # (40, 40, C)
    # combined conv weight Wc[f, c, k] = sum_g W2[f, g, c] * W1[g, k]
    wc = jnp.einsum("fgc,gk->fck", w2, w1)                           # (40, C, 25)
    # conv1 bias pushed through conv2
    bias_c = jnp.einsum("fgc,g->f", w2, params["conv1_b"])           # (40,)
    # fold BatchNorm (inference / running stats) into scale & shift
    a = params["bn_gamma"] * jax.lax.rsqrt(params["bn_var"] + BN_EPS)
    shift = (a * (bias_c - params["bn_mean"]) + params["bn_beta"]).reshape(N_FILT, 1)
    wc = wc * a[:, None, None]

    # pad channels to a sublane multiple; flatten contraction as k*C_pad + c
    C_pad = max(8, ((C + 7) // 8) * 8)
    wc_pad = jnp.zeros((N_FILT, C_pad, K_TIME), jnp.float32).at[:, :C, :].set(wc)
    wc_flat = jnp.transpose(wc_pad, (0, 2, 1)).reshape(N_FILT, K_TIME * C_pad)
    wc_flat = wc_flat.astype(matmul_dtype)

    # banded pooling matrix: pooled[:, p] = mean(y2[:, p*15 : p*15+75])
    t_idx = jnp.arange(T_out)[:, None]
    p_off = jnp.arange(P_out)[None, :] * POOL_S
    pmat = jnp.where((t_idx >= p_off) & (t_idx < p_off + POOL_W),
                     1.0 / POOL_W, 0.0).astype(jnp.float32)          # (T_out, P_out)

    # Linear weight in (n_cls, 40, P_out) layout (PyTorch flatten order f*P_out + p)
    wl3 = params["lin_w"].reshape(n_cls, N_FILT, P_out).astype(jnp.float32)
    bl = params["lin_b"].reshape(1, n_cls).astype(jnp.float32)

    # ---- input layout: drop the singleton plane, pad channels & batch ----
    BB = min(block_batch, B)
    B_pad = ((B + BB - 1) // BB) * BB
    xp = jnp.zeros((B_pad, C_pad, T), jnp.float32).at[:B, :C, :].set(x[:, 0, :, :])

    logits = pl.pallas_call(
        _fused_kernel,
        out_shape=jax.ShapeDtypeStruct((B_pad, n_cls), jnp.float32),
        grid_spec=pltpu.PrefetchScalarGridSpec(
            num_scalar_prefetch=0,
            grid=(B_pad // BB,),
            in_specs=[
                pl.BlockSpec((BB, C_pad, T), lambda g: (g, 0, 0)),
                pl.BlockSpec((N_FILT, K_TIME * C_pad), lambda g: (0, 0)),
                pl.BlockSpec((N_FILT, 1), lambda g: (0, 0)),
                pl.BlockSpec((T_out, P_out), lambda g: (0, 0)),
                pl.BlockSpec((n_cls, N_FILT, P_out), lambda g: (0, 0, 0)),
                pl.BlockSpec((1, n_cls), lambda g: (0, 0)),
            ],
            out_specs=pl.BlockSpec((BB, n_cls), lambda g: (g, 0)),
        ),
        compiler_params=pltpu.CompilerParams(
            dimension_semantics=("parallel",),        # batch blocks are independent
            vmem_limit_bytes=32 * 1024 * 1024,
        ),
    )(xp, wc_flat, shift, pmat, wl3, bl)

    # Dropout (inference) is identity; padded batch rows are dropped here.
    return logits[:B]


# ----------------------------------------------------------------------------
# Pure-JAX reference (mirrors the PyTorch forward, eval mode) for self-check.
# ----------------------------------------------------------------------------
def reference_forward(x, params):
    B, _, C, T = x.shape
    T_out = T - K_TIME + 1
    P_out = (T_out - POOL_W) // POOL_S + 1
    w1 = renorm_maxnorm(params["conv1_w"], 2.0)[:, 0, 0, :]          # (40, 25)
    w2 = renorm_maxnorm(params["conv2_w"], 2.0)[:, :, :, 0]          # (40, 40, C)
    # conv1 (1->40, (1,25)) with bias
    xs = jnp.stack([x[:, 0, :, k:k + T_out] for k in range(K_TIME)], axis=-1)  # (B,C,T_out,25)
    out1 = jnp.einsum("bctk,gk->bgct", xs, w1) + params["conv1_b"][None, :, None, None]
    # conv2 (40->40, (C,1)), no bias
    out2 = jnp.einsum("bgct,fgc->bft", out1, w2)                      # (B, 40, T_out)
    # BatchNorm (running stats)
    a = params["bn_gamma"] * jax.lax.rsqrt(params["bn_var"] + BN_EPS)
    y = a[None, :, None] * (out2 - params["bn_mean"][None, :, None]) + params["bn_beta"][None, :, None]
    # square -> avgpool(75, 15) -> log
    y2 = y * y
    pooled = jnp.stack(
        [y2[:, :, p * POOL_S:p * POOL_S + POOL_W].mean(axis=-1) for p in range(P_out)],
        axis=-1)                                                      # (B, 40, P_out)
    lf = jnp.log(pooled)
    feats = lf.reshape(B, -1)                                         # f*P_out + p order
    return feats @ params["lin_w"].T + params["lin_b"]


def init_params(key, channels, num_classes, n_time):
    """Deterministic synthetic parameters matching the module's shapes."""
    T_out = n_time - K_TIME + 1
    P_out = (T_out - POOL_W) // POOL_S + 1
    F = N_FILT * P_out
    ks = jax.random.split(key, 5)
    return dict(
        conv1_w=jax.random.normal(ks[0], (N_FILT, 1, 1, K_TIME), jnp.float32) * 0.1,
        conv1_b=jax.random.normal(ks[1], (N_FILT,), jnp.float32) * 0.1,
        conv2_w=jax.random.normal(ks[2], (N_FILT, N_FILT, channels, 1), jnp.float32) * 0.1,
        bn_gamma=jnp.ones((N_FILT,), jnp.float32),
        bn_beta=jnp.zeros((N_FILT,), jnp.float32),
        bn_mean=jnp.zeros((N_FILT,), jnp.float32),
        bn_var=jnp.ones((N_FILT,), jnp.float32),
        lin_w=jax.random.normal(ks[3], (num_classes, F), jnp.float32) * 0.1,
        lin_b=jax.random.normal(ks[4], (num_classes,), jnp.float32) * 0.1,
    )


if __name__ == "__main__":
    key = jax.random.PRNGKey(0)
    kx, kp = jax.random.split(key)

    B = 2
    channels = 4                  # EEG channels (n_chan)
    sampling_r, window = 60, 2
    n_time = sampling_r * window  # 120 time samples -> T_out = 96 >= 75
    num_classes = 4

    x = jax.random.normal(kx, (B, 1, channels, n_time), jnp.float32)
    params = init_params(kp, channels, num_classes, n_time)

    logits = shallowconvnet_forward(x, params)
    jax.block_until_ready(logits)
    assert logits.shape == (B, num_classes)
    assert bool(jnp.all(jnp.isfinite(logits)))

    ref = reference_forward(x, params)
    assert bool(jnp.allclose(logits, ref, rtol=5e-3, atol=5e-3)), "kernel/reference mismatch"

    print("KERNEL_OK")
</pallas_src>

<mosaic_0001>
module attributes {stable_mosaic.version = 11 : i64} {
  func.func @_fused_kernel(%arg0: i32, %arg1: memref<2x8x120xf32, #tpu.memory_space<vmem>>, %arg2: memref<40x200xf32, #tpu.memory_space<vmem>>, %arg3: memref<40x1xf32, #tpu.memory_space<vmem>>, %arg4: memref<96x2xf32, #tpu.memory_space<vmem>>, %arg5: memref<4x40x2xf32, #tpu.memory_space<vmem>>, %arg6: memref<1x4xf32, #tpu.memory_space<vmem>>, %arg7: memref<2x4xf32, #tpu.memory_space<vmem>>) attributes {dimension_semantics = [#tpu.dimension_semantics<parallel>], iteration_bounds = array<i64: 1>, scalar_prefetch = 0 : i64, scratch_operands = 0 : i64, tpu.core_type = #tpu.core_type<tc>, window_params = [{transform_indices = @transform_0, window_bounds = array<i64: 2, 8, 120>}, {pipeline_mode = #tpu.pipeline_mode<synchronous>, transform_indices = @transform_1, window_bounds = array<i64: 40, 200>}, {pipeline_mode = #tpu.pipeline_mode<synchronous>, transform_indices = @transform_2, window_bounds = array<i64: 40, 1>}, {pipeline_mode = #tpu.pipeline_mode<synchronous>, transform_indices = @transform_3, window_bounds = array<i64: 96, 2>}, {pipeline_mode = #tpu.pipeline_mode<synchronous>, transform_indices = @transform_4, window_bounds = array<i64: 4, 40, 2>}, {pipeline_mode = #tpu.pipeline_mode<synchronous>, transform_indices = @transform_5, window_bounds = array<i64: 1, 4>}, {transform_indices = @transform_6, window_bounds = array<i64: 2, 4>}]} {
    %c0 = arith.constant 0 : index
    %c0_0 = arith.constant 0 : index
    %0 = vector.load %arg2[%c0, %c0_0] : memref<40x200xf32, #tpu.memory_space<vmem>>, vector<40x200xf32>
    %c0_1 = arith.constant 0 : index
    %c0_2 = arith.constant 0 : index
    %1 = vector.load %arg3[%c0_1, %c0_2] : memref<40x1xf32, #tpu.memory_space<vmem>>, vector<40x1xf32>
    %c0_3 = arith.constant 0 : index
    %c0_4 = arith.constant 0 : index
    %2 = vector.load %arg4[%c0_3, %c0_4] : memref<96x2xf32, #tpu.memory_space<vmem>>, vector<96x2xf32>
    %c0_5 = arith.constant 0 : index
    %c0_6 = arith.constant 0 : index
    %c0_7 = arith.constant 0 : index
    %3 = vector.load %arg5[%c0_5, %c0_6, %c0_7] : memref<4x40x2xf32, #tpu.memory_space<vmem>>, vector<4x40x2xf32>
    %c0_8 = arith.constant 0 : index
    %c0_9 = arith.constant 0 : index
    %c0_10 = arith.constant 0 : index
    %4 = vector.load %arg1[%c0_8, %c0_9, %c0_10] : memref<2x8x120xf32, #tpu.memory_space<vmem>>, vector<2x8x120xf32>
    %5 = vector.extract_strided_slice %4 {offsets = [0, 0, 0], sizes = [2, 8, 96], strides = [1, 1, 1]} : vector<2x8x120xf32> to vector<2x8x96xf32>
    %6 = vector.extract_strided_slice %4 {offsets = [0, 0, 1], sizes = [2, 8, 96], strides = [1, 1, 1]} : vector<2x8x120xf32> to vector<2x8x96xf32>
    %7 = vector.extract_strided_slice %4 {offsets = [0, 0, 2], sizes = [2, 8, 96], strides = [1, 1, 1]} : vector<2x8x120xf32> to vector<2x8x96xf32>
    %8 = vector.extract_strided_slice %4 {offsets = [0, 0, 3], sizes = [2, 8, 96], strides = [1, 1, 1]} : vector<2x8x120xf32> to vector<2x8x96xf32>
    %9 = vector.extract_strided_slice %4 {offsets = [0, 0, 4], sizes = [2, 8, 96], strides = [1, 1, 1]} : vector<2x8x120xf32> to vector<2x8x96xf32>
    %10 = vector.extract_strided_slice %4 {offsets = [0, 0, 5], sizes = [2, 8, 96], strides = [1, 1, 1]} : vector<2x8x120xf32> to vector<2x8x96xf32>
    %11 = vector.extract_strided_slice %4 {offsets = [0, 0, 6], sizes = [2, 8, 96], strides = [1, 1, 1]} : vector<2x8x120xf32> to vector<2x8x96xf32>
    %12 = vector.extract_strided_slice %4 {offsets = [0, 0, 7], sizes = [2, 8, 96], strides = [1, 1, 1]} : vector<2x8x120xf32> to vector<2x8x96xf32>
    %13 = vector.extract_strided_slice %4 {offsets = [0, 0, 8], sizes = [2, 8, 96], strides = [1, 1, 1]} : vector<2x8x120xf32> to vector<2x8x96xf32>
    %14 = vector.extract_strided_slice %4 {offsets = [0, 0, 9], sizes = [2, 8, 96], strides = [1, 1, 1]} : vector<2x8x120xf32> to vector<2x8x96xf32>
    %15 = vector.extract_strided_slice %4 {offsets = [0, 0, 10], sizes = [2, 8, 96], strides = [1, 1, 1]} : vector<2x8x120xf32> to vector<2x8x96xf32>
    %16 = vector.extract_strided_slice %4 {offsets = [0, 0, 11], sizes = [2, 8, 96], strides = [1, 1, 1]} : vector<2x8x120xf32> to vector<2x8x96xf32>
    %17 = vector.extract_strided_slice %4 {offsets = [0, 0, 12], sizes = [2, 8, 96], strides = [1, 1, 1]} : vector<2x8x120xf32> to vector<2x8x96xf32>
    %18 = vector.extract_strided_slice %4 {offsets = [0, 0, 13], sizes = [2, 8, 96], strides = [1, 1, 1]} : vector<2x8x120xf32> to vector<2x8x96xf32>
    %19 = vector.extract_strided_slice %4 {offsets = [0, 0, 14], sizes = [2, 8, 96], strides = [1, 1, 1]} : vector<2x8x120xf32> to vector<2x8x96xf32>
    %20 = vector.extract_strided_slice %4 {offsets = [0, 0, 15], sizes = [2, 8, 96], strides = [1, 1, 1]} : vector<2x8x120xf32> to vector<2x8x96xf32>
    %21 = vector.extract_strided_slice %4 {offsets = [0, 0, 16], sizes = [2, 8, 96], strides = [1, 1, 1]} : vector<2x8x120xf32> to vector<2x8x96xf32>
    %22 = vector.extract_strided_slice %4 {offsets = [0, 0, 17], sizes = [2, 8, 96], strides = [1, 1, 1]} : vector<2x8x120xf32> to vector<2x8x96xf32>
    %23 = vector.extract_strided_slice %4 {offsets = [0, 0, 18], sizes = [2, 8, 96], strides = [1, 1, 1]} : vector<2x8x120xf32> to vector<2x8x96xf32>
    %24 = vector.extract_strided_slice %4 {offsets = [0, 0, 19], sizes = [2, 8, 96], strides = [1, 1, 1]} : vector<2x8x120xf32> to vector<2x8x96xf32>
    %25 = vector.extract_strided_slice %4 {offsets = [0, 0, 20], sizes = [2, 8, 96], strides = [1, 1, 1]} : vector<2x8x120xf32> to vector<2x8x96xf32>
    %26 = vector.extract_strided_slice %4 {offsets = [0, 0, 21], sizes = [2, 8, 96], strides = [1, 1, 1]} : vector<2x8x120xf32> to vector<2x8x96xf32>
    %27 = vector.extract_strided_slice %4 {offsets = [0, 0, 22], sizes = [2, 8, 96], strides = [1, 1, 1]} : vector<2x8x120xf32> to vector<2x8x96xf32>
    %28 = vector.extract_strided_slice %4 {offsets = [0, 0, 23], sizes = [2, 8, 96], strides = [1, 1, 1]} : vector<2x8x120xf32> to vector<2x8x96xf32>
    %29 = vector.extract_strided_slice %4 {offsets = [0, 0, 24], sizes = [2, 8, 96], strides = [1, 1, 1]} : vector<2x8x120xf32> to vector<2x8x96xf32>
    %30 = tpu.concatenate %5, %6, %7, %8, %9, %10, %11, %12, %13, %14, %15, %16, %17, %18, %19, %20 in 1 : vector<2x8x96xf32>, vector<2x8x96xf32>, vector<2x8x96xf32>, vector<2x8x96xf32>, vector<2x8x96xf32>, vector<2x8x96xf32>, vector<2x8x96xf32>, vector<2x8x96xf32>, vector<2x8x96xf32>, vector<2x8x96xf32>, vector<2x8x96xf32>, vector<2x8x96xf32>, vector<2x8x96xf32>, vector<2x8x96xf32>, vector<2x8x96xf32>, vector<2x8x96xf32> -> vector<2x128x96xf32>
    %31 = tpu.concatenate %21, %22, %23, %24, %25, %26, %27, %28, %29 in 1 : vector<2x8x96xf32>, vector<2x8x96xf32>, vector<2x8x96xf32>, vector<2x8x96xf32>, vector<2x8x96xf32>, vector<2x8x96xf32>, vector<2x8x96xf32>, vector<2x8x96xf32>, vector<2x8x96xf32> -> vector<2x72x96xf32>
    %32 = tpu.concatenate %30, %31 in 1 : vector<2x128x96xf32>, vector<2x72x96xf32> -> vector<2x200x96xf32>
    %33 = vector.extract_strided_slice %32 {offsets = [0, 0, 0], sizes = [1, 200, 96], strides = [1, 1, 1]} : vector<2x200x96xf32> to vector<1x200x96xf32>
    %34 = vector.shape_cast %33 : vector<1x200x96xf32> to vector<200x96xf32>
    %cst = arith.constant dense<0.000000e+00> : vector<40x96xf32>
    %35 = tpu.matmul %0, %34, %cst {dimension_numbers = #tpu.dot_dimension_numbers<[1], [0], [0], [1], [0, 0, 1, 1], [], []>} : vector<40x200xf32>, vector<200x96xf32>, vector<40x96xf32> -> vector<40x96xf32>
    %36 = vector.broadcast %1 : vector<40x1xf32> to vector<40x96xf32>
    %37 = arith.addf %35, %36 : vector<40x96xf32>
    %38 = arith.mulf %37, %37 : vector<40x96xf32>
    %cst_11 = arith.constant dense<0.000000e+00> : vector<40x2xf32>
    %39 = tpu.matmul %38, %2, %cst_11 {dimension_numbers = #tpu.dot_dimension_numbers<[1], [0], [0], [1], [0, 0, 1, 1], [], []>} : vector<40x96xf32>, vector<96x2xf32>, vector<40x2xf32> -> vector<40x2xf32>
    %40 = math.log %39 : vector<40x2xf32>
    %41 = vector.extract_strided_slice %32 {offsets = [1, 0, 0], sizes = [1, 200, 96], strides = [1, 1, 1]} : vector<2x200x96xf32> to vector<1x200x96xf32>
    %42 = vector.shape_cast %41 : vector<1x200x96xf32> to vector<200x96xf32>
    %cst_12 = arith.constant dense<0.000000e+00> : vector<40x96xf32>
    %43 = tpu.matmul %0, %42, %cst_12 {dimension_numbers = #tpu.dot_dimension_numbers<[1], [0], [0], [1], [0, 0, 1, 1], [], []>} : vector<40x200xf32>, vector<200x96xf32>, vector<40x96xf32> -> vector<40x96xf32>
    %44 = vector.broadcast %1 : vector<40x1xf32> to vector<40x96xf32>
    %45 = arith.addf %43, %44 : vector<40x96xf32>
    %46 = arith.mulf %45, %45 : vector<40x96xf32>
    %cst_13 = arith.constant dense<0.000000e+00> : vector<40x2xf32>
    %47 = tpu.matmul %46, %2, %cst_13 {dimension_numbers = #tpu.dot_dimension_numbers<[1], [0], [0], [1], [0, 0, 1, 1], [], []>} : vector<40x96xf32>, vector<96x2xf32>, vector<40x2xf32> -> vector<40x2xf32>
    %48 = math.log %47 : vector<40x2xf32>
    %49 = vector.shape_cast %40 : vector<40x2xf32> to vector<1x40x2xf32>
    %50 = vector.shape_cast %48 : vector<40x2xf32> to vector<1x40x2xf32>
    %51 = tpu.concatenate %49, %50 in 0 : vector<1x40x2xf32>, vector<1x40x2xf32> -> vector<2x40x2xf32>
    %52 = vector.extract_strided_slice %3 {offsets = [0, 0, 0], sizes = [1, 40, 2], strides = [1, 1, 1]} : vector<4x40x2xf32> to vector<1x40x2xf32>
    %53 = vector.shape_cast %52 : vector<1x40x2xf32> to vector<40x2xf32>
    %54 = vector.shape_cast %53 : vector<40x2xf32> to vector<1x40x2xf32>
    %55 = vector.broadcast %54 : vector<1x40x2xf32> to vector<2x40x2xf32>
    %56 = arith.mulf %51, %55 : vector<2x40x2xf32>
    %cst_14 = arith.constant dense<0.000000e+00> : vector<2x40xf32>
    %57 = vector.multi_reduction <add>, %56, %cst_14 [2] : vector<2x40x2xf32> to vector<2x40xf32>
    %cst_15 = arith.constant dense<0.000000e+00> : vector<2xf32>
    %58 = vector.multi_reduction <add>, %57, %cst_15 [1] : vector<2x40xf32> to vector<2xf32>
    %59 = vector.shape_cast %58 : vector<2xf32> to vector<2x1xf32>
    %60 = vector.extract_strided_slice %3 {offsets = [1, 0, 0], sizes = [1, 40, 2], strides = [1, 1, 1]} : vector<4x40x2xf32> to vector<1x40x2xf32>
    %61 = vector.shape_cast %60 : vector<1x40x2xf32> to vector<40x2xf32>
    %62 = vector.shape_cast %61 : vector<40x2xf32> to vector<1x40x2xf32>
    %63 = vector.broadcast %62 : vector<1x40x2xf32> to vector<2x40x2xf32>
    %64 = arith.mulf %51, %63 : vector<2x40x2xf32>
    %cst_16 = arith.constant dense<0.000000e+00> : vector<2x40xf32>
    %65 = vector.multi_reduction <add>, %64, %cst_16 [2] : vector<2x40x2xf32> to vector<2x40xf32>
    %cst_17 = arith.constant dense<0.000000e+00> : vector<2xf32>
    %66 = vector.multi_reduction <add>, %65, %cst_17 [1] : vector<2x40xf32> to vector<2xf32>
    %67 = vector.shape_cast %66 : vector<2xf32> to vector<2x1xf32>
    %68 = vector.extract_strided_slice %3 {offsets = [2, 0, 0], sizes = [1, 40, 2], strides = [1, 1, 1]} : vector<4x40x2xf32> to vector<1x40x2xf32>
    %69 = vector.shape_cast %68 : vector<1x40x2xf32> to vector<40x2xf32>
    %70 = vector.shape_cast %69 : vector<40x2xf32> to vector<1x40x2xf32>
    %71 = vector.broadcast %70 : vector<1x40x2xf32> to vector<2x40x2xf32>
    %72 = arith.mulf %51, %71 : vector<2x40x2xf32>
    %cst_18 = arith.constant dense<0.000000e+00> : vector<2x40xf32>
    %73 = vector.multi_reduction <add>, %72, %cst_18 [2] : vector<2x40x2xf32> to vector<2x40xf32>
    %cst_19 = arith.constant dense<0.000000e+00> : vector<2xf32>
    %74 = vector.multi_reduction <add>, %73, %cst_19 [1] : vector<2x40xf32> to vector<2xf32>
    %75 = vector.shape_cast %74 : vector<2xf32> to vector<2x1xf32>
    %76 = vector.extract_strided_slice %3 {offsets = [3, 0, 0], sizes = [1, 40, 2], strides = [1, 1, 1]} : vector<4x40x2xf32> to vector<1x40x2xf32>
    %77 = vector.shape_cast %76 : vector<1x40x2xf32> to vector<40x2xf32>
    %78 = vector.shape_cast %77 : vector<40x2xf32> to vector<1x40x2xf32>
    %79 = vector.broadcast %78 : vector<1x40x2xf32> to vector<2x40x2xf32>
    %80 = arith.mulf %51, %79 : vector<2x40x2xf32>
    %cst_20 = arith.constant dense<0.000000e+00> : vector<2x40xf32>
    %81 = vector.multi_reduction <add>, %80, %cst_20 [2] : vector<2x40x2xf32> to vector<2x40xf32>
    %cst_21 = arith.constant dense<0.000000e+00> : vector<2xf32>
    %82 = vector.multi_reduction <add>, %81, %cst_21 [1] : vector<2x40xf32> to vector<2xf32>
    %83 = vector.shape_cast %82 : vector<2xf32> to vector<2x1xf32>
    %84 = tpu.concatenate %59, %67, %75, %83 in 1 : vector<2x1xf32>, vector<2x1xf32>, vector<2x1xf32>, vector<2x1xf32> -> vector<2x4xf32>
    %c0_22 = arith.constant 0 : index
    %c0_23 = arith.constant 0 : index
    %85 = vector.load %arg6[%c0_22, %c0_23] : memref<1x4xf32, #tpu.memory_space<vmem>>, vector<1x4xf32>
    %86 = vector.broadcast %85 : vector<1x4xf32> to vector<2x4xf32>
    %87 = arith.addf %84, %86 : vector<2x4xf32>
    %c0_24 = arith.constant 0 : index
    %c0_25 = arith.constant 0 : index
    %88 = vector.load %arg7[%c0_24, %c0_25] : memref<2x4xf32, #tpu.memory_space<vmem>>, vector<2x4xf32>
    tpu.vector_store %arg7[%c0_24, %c0_25], %87 {strides = array<i32>} : memref<2x4xf32, #tpu.memory_space<vmem>>, vector<2x4xf32>,
    return
  }
  func.func @transform_0(%arg0: i32) -> (i32, i32, i32) {
    %c0_i32 = arith.constant 0 : i32
    %c0_i32_0 = arith.constant 0 : i32
    %c0_i32_1 = arith.constant 0 : i32
    return %arg0, %c0_i32, %c0_i32_0 : i32, i32, i32
  }
  func.func @transform_1(%arg0: i32) -> (i32, i32) {
    %c0_i32 = arith.constant 0 : i32
    %c0_i32_0 = arith.constant 0 : i32
    %c0_i32_1 = arith.constant 0 : i32
    return %c0_i32, %c0_i32_0 : i32, i32
  }
  func.func @transform_2(%arg0: i32) -> (i32, i32) {
    %c0_i32 = arith.constant 0 : i32
    %c0_i32_0 = arith.constant 0 : i32
    %c0_i32_1 = arith.constant 0 : i32
    return %c0_i32, %c0_i32_0 : i32, i32
  }
  func.func @transform_3(%arg0: i32) -> (i32, i32) {
    %c0_i32 = arith.constant 0 : i32
    %c0_i32_0 = arith.constant 0 : i32
    %c0_i32_1 = arith.constant 0 : i32
    return %c0_i32, %c0_i32_0 : i32, i32
  }
  func.func @transform_4(%arg0: i32) -> (i32, i32, i32) {
    %c0_i32 = arith.constant 0 : i32
    %c0_i32_0 = arith.constant 0 : i32
    %c0_i32_1 = arith.constant 0 : i32
    %c0_i32_2 = arith.constant 0 : i32
    return %c0_i32, %c0_i32_0, %c0_i32_1 : i32, i32, i32
  }
  func.func @transform_5(%arg0: i32) -> (i32, i32) {
    %c0_i32 = arith.constant 0 : i32
    %c0_i32_0 = arith.constant 0 : i32
    %c0_i32_1 = arith.constant 0 : i32
    return %c0_i32, %c0_i32_0 : i32, i32
  }
  func.func @transform_6(%arg0: i32) -> (i32, i32) {
    %c0_i32 = arith.constant 0 : i32
    %c0_i32_0 = arith.constant 0 : i32
    return %arg0, %c0_i32 : i32, i32
  }
}

</mosaic_0001>

<llo_original>
// kernel: tpu_custom_call.1
$region0: #{tpu_custom_call.1}
  #allocation0 [shape = 'u32[]', space=smem, size = 0x4, offset = 0x4, fixed_abs, tag = 'smem constant byte address 0x4 - core index']
  #allocation1 [shape = 'u32[144,128]{1,0:T(1,128)}', space=vmem, size = 0x12000, scoped, tag = 'internal scratch']
  %s0 = inlined_call_operand.vmem [shape: f32[2,8,120], index: 0, kind: input, shape index: {}]
  %s1 = inlined_call_operand.vmem [shape: f32[40,200], index: 1, kind: input, shape index: {}]
  %s2 = inlined_call_operand.vmem [shape: f32[40,1], index: 2, kind: input, shape index: {}]
  %s3 = inlined_call_operand.vmem [shape: f32[96,2], index: 3, kind: input, shape index: {}]
  %s4 = inlined_call_operand.vmem [shape: f32[4,40,2], index: 4, kind: input, shape index: {}]
  %s5 = inlined_call_operand.vmem [shape: f32[1,4], index: 5, kind: input, shape index: {}]
  %s6 = inlined_call_operand.hbm [shape: f32[2,4], index: 6, kind: output, shape index: {}]
  %s7 = sld [smem:[#allocation0]]
  $region34: #{tpu_custom_call.1} parent=0
    _
  %s9 = ssub.s32 1, %s7
  %s10 = scalar_select 0, %s9, %s7
  $region1: #{tpu_custom_call.1} parent=0
    #allocation2 [shape = 'u8[1024]{0}', space=vmem, size = 0x400, scoped, tag = 'output window, operand 0, single buffered']
    #allocation3 [shape = 's32[1]{0}', space=sflag, size = 0x4, scoped, tag = 'scoped memory for tpu_custom_call.1']
    %11 = vsyncpa [#allocation3], 0
    // Predicated region
    $region2: #{tpu_custom_call.1} parent=1 // pred_check
      _
    $region3: #{tpu_custom_call.1} parent=1 // pred_check_branch
      %13 = sbr.rel (0) target = $region5
    $region4: #{tpu_custom_call.1} parent=1 // pred_region
      _
    $region5: #{tpu_custom_call.1} parent=1 // pred_fallthru
      _
    // Predicated region
    $region6: #{tpu_custom_call.1} parent=1 // pred_check
      _
    $region7: #{tpu_custom_call.1} parent=1 // pred_check_branch
      %15 = sbr.rel (0) target = $region9
    $region8: #{tpu_custom_call.1} parent=1 // pred_region
      _
    $region9: #{tpu_custom_call.1} parent=1 // pred_fallthru
      _
    // Predicated region
    $region10: #{tpu_custom_call.1} parent=1 // pred_check
      _
    $region11: #{tpu_custom_call.1} parent=1 // pred_check_branch
      %17 = sbr.rel (0) target = $region13
    $region12: #{tpu_custom_call.1} parent=1 // pred_region
      _
    $region13: #{tpu_custom_call.1} parent=1 // pred_fallthru
      _
    // Predicated region
    $region14: #{tpu_custom_call.1} parent=1 // pred_check
      _
    $region15: #{tpu_custom_call.1} parent=1 // pred_check_branch
      %19 = sbr.rel (0) target = $region17
    $region16: #{tpu_custom_call.1} parent=1 // pred_region
      _
    $region17: #{tpu_custom_call.1} parent=1 // pred_fallthru
      _
    // Predicated region
    $region18: #{tpu_custom_call.1} parent=1 // pred_check
      _
    $region19: #{tpu_custom_call.1} parent=1 // pred_check_branch
      %21 = sbr.rel (0) target = $region21
    $region20: #{tpu_custom_call.1} parent=1 // pred_region
      _
    $region21: #{tpu_custom_call.1} parent=1 // pred_fallthru
      _
    // Predicated region
    $region22: #{tpu_custom_call.1} parent=1 // pred_check
      _
    $region23: #{tpu_custom_call.1} parent=1 // pred_check_branch
      %23 = sbr.rel (0) target = $region25
    $region24: #{tpu_custom_call.1} parent=1 // pred_region
      _
    $region25: #{tpu_custom_call.1} parent=1 // pred_fallthru
      _
    %v24 = vld [vmem:[%s1] sm:$0xff]
    %v25 = vld [vmem:[%s1 + $0x8] sm:$0xff]
    %v26 = vld [vmem:[%s1 + $0x10] sm:$0xff]
    %v27 = vld [vmem:[%s1 + $0x18] sm:$0xff]
    %v28 = vld [vmem:[%s1 + $0x20] sm:$0xff]
    %v29 = vld [vmem:[%s1 + $0x28] sm:$0xff]
    %v30 = vld [vmem:[%s1 + $0x30] sm:$0xff]
    %v31 = vld [vmem:[%s1 + $0x38] sm:$0xff]
    %v32 = vld [vmem:[%s1 + $0x40] sm:$0xff]
    %v33 = vld [vmem:[%s1 + $0x48] sm:$0xff]
    %v34 = vld [vmem:[%s2] sm:$0xff]
    %v35 = vld [vmem:[%s2 + $0x8] sm:$0xff]
    %v36 = vld [vmem:[%s2 + $0x10] sm:$0xff]
    %v37 = vld [vmem:[%s2 + $0x18] sm:$0xff]
    %v38 = vld [vmem:[%s2 + $0x20] sm:$0xff]
    %v39 = vld [vmem:[%s3] sm:$0xff]
    %v40 = vld [vmem:[%s3 + $0x8] sm:$0xff]
    %v41 = vld [vmem:[%s3 + $0x10] sm:$0xff]
    %v42 = vld [vmem:[%s3 + $0x18] sm:$0xff]
    %v43 = vld [vmem:[%s3 + $0x20] sm:$0xff]
    %v44 = vld [vmem:[%s3 + $0x28] sm:$0xff]
    %v45 = vld [vmem:[%s3 + $0x30] sm:$0xff]
    %v46 = vld [vmem:[%s3 + $0x38] sm:$0xff]
    %v47 = vld [vmem:[%s3 + $0x40] sm:$0xff]
    %v48 = vld [vmem:[%s3 + $0x48] sm:$0xff]
    %v49 = vld [vmem:[%s3 + $0x50] sm:$0xff]
    %v50 = vld [vmem:[%s3 + $0x58] sm:$0xff]
    %v51 = vld [vmem:[%s4] sm:$0xff]
    %v52 = vld [vmem:[%s4 + $0x8] sm:$0xff]
    %v53 = vld [vmem:[%s4 + $0x10] sm:$0xff]
    %v54 = vld [vmem:[%s4 + $0x18] sm:$0xff]
    %v55 = vld [vmem:[%s4 + $0x20] sm:$0xff]
    %v56 = vld [vmem:[%s4 + $0x28] sm:$0xff]
    %v57 = vld [vmem:[%s4 + $0x30] sm:$0xff]
    %v58 = vld [vmem:[%s4 + $0x38] sm:$0xff]
    %v59 = vld [vmem:[%s4 + $0x40] sm:$0xff]
    %v60 = vld [vmem:[%s4 + $0x48] sm:$0xff]
    %v61 = vld [vmem:[%s4 + $0x50] sm:$0xff]
    %v62 = vld [vmem:[%s4 + $0x58] sm:$0xff]
    %v63 = vld [vmem:[%s4 + $0x60] sm:$0xff]
    %v64 = vld [vmem:[%s4 + $0x68] sm:$0xff]
    %v65 = vld [vmem:[%s4 + $0x70] sm:$0xff]
    %v66 = vld [vmem:[%s4 + $0x78] sm:$0xff]
    %v67 = vld [vmem:[%s4 + $0x80] sm:$0xff]
    %v68 = vld [vmem:[%s4 + $0x88] sm:$0xff]
    %v69 = vld [vmem:[%s4 + $0x90] sm:$0xff]
    %v70 = vld [vmem:[%s4 + $0x98] sm:$0xff]
    %v71 = vld [vmem:[%s0] sm:$0xff]
    %v72 = vld [vmem:[%s0 + $0x8] sm:$0xff]
    %75 = vrot.lane.b32.xlu0 %v71, 127
    %v76 = vpop.permute.xlu0 %75
    %77 = vrot.lane.b32.xlu0 %v72, 127
    %v78 = vpop.permute.xlu0 %77
    %81 = vrot.lane.b32.xlu0 %v71, 126
    %v82 = vpop.permute.xlu0 %81
    %83 = vrot.lane.b32.xlu0 %v72, 126
    %v84 = vpop.permute.xlu0 %83
    %87 = vrot.lane.b32.xlu0 %v71, 125
    %v88 = vpop.permute.xlu0 %87
    %89 = vrot.lane.b32.xlu0 %v72, 125
    %v90 = vpop.permute.xlu0 %89
    %93 = vrot.lane.b32.xlu0 %v71, 124
    %v94 = vpop.permute.xlu0 %93
    %95 = vrot.lane.b32.xlu0 %v72, 124
    %v96 = vpop.permute.xlu0 %95
    %99 = vrot.lane.b32.xlu0 %v71, 123
    %v100 = vpop.permute.xlu0 %99
    %101 = vrot.lane.b32.xlu0 %v72, 123
    %v102 = vpop.permute.xlu0 %101
    %105 = vrot.lane.b32.xlu0 %v71, 122
    %v106 = vpop.permute.xlu0 %105
    %107 = vrot.lane.b32.xlu0 %v72, 122
    %v108 = vpop.permute.xlu0 %107
    %111 = vrot.lane.b32.xlu0 %v71, 121
    %v112 = vpop.permute.xlu0 %111
    %113 = vrot.lane.b32.xlu0 %v72, 121
    %v114 = vpop.permute.xlu0 %113
    %117 = vrot.lane.b32.xlu0 %v71, 120
    %v118 = vpop.permute.xlu0 %117
    %119 = vrot.lane.b32.xlu0 %v72, 120
    %v120 = vpop.permute.xlu0 %119
    %123 = vrot.lane.b32.xlu0 %v71, 119
    %v124 = vpop.permute.xlu0 %123
    %125 = vrot.lane.b32.xlu0 %v72, 119
    %v126 = vpop.permute.xlu0 %125
    %129 = vrot.lane.b32.xlu0 %v71, 118
    %v130 = vpop.permute.xlu0 %129
    %131 = vrot.lane.b32.xlu0 %v72, 118
    %v132 = vpop.permute.xlu0 %131
    %135 = vrot.lane.b32.xlu0 %v71, 117
    %v136 = vpop.permute.xlu0 %135
    %137 = vrot.lane.b32.xlu0 %v72, 117
    %v138 = vpop.permute.xlu0 %137
    %141 = vrot.lane.b32.xlu0 %v71, 116
    %v142 = vpop.permute.xlu0 %141
    %143 = vrot.lane.b32.xlu0 %v72, 116
    %v144 = vpop.permute.xlu0 %143
    %147 = vrot.lane.b32.xlu0 %v71, 115
    %v148 = vpop.permute.xlu0 %147
    %149 = vrot.lane.b32.xlu0 %v72, 115
    %v150 = vpop.permute.xlu0 %149
    %153 = vrot.lane.b32.xlu0 %v71, 114
    %v154 = vpop.permute.xlu0 %153
    %155 = vrot.lane.b32.xlu0 %v72, 114
    %v156 = vpop.permute.xlu0 %155
    %159 = vrot.lane.b32.xlu0 %v71, 113
    %v160 = vpop.permute.xlu0 %159
    %161 = vrot.lane.b32.xlu0 %v72, 113
    %v162 = vpop.permute.xlu0 %161
    %165 = vrot.lane.b32.xlu0 %v71, 112
    %v166 = vpop.permute.xlu0 %165
    %167 = vrot.lane.b32.xlu0 %v76, 112
    %v168 = vpop.permute.xlu0 %167
    %169 = vrot.lane.b32.xlu0 %v82, 112
    %v170 = vpop.permute.xlu0 %169
    %171 = vrot.lane.b32.xlu0 %v88, 112
    %v172 = vpop.permute.xlu0 %171
    %173 = vrot.lane.b32.xlu0 %v94, 112
    %v174 = vpop.permute.xlu0 %173
    %175 = vrot.lane.b32.xlu0 %v100, 112
    %v176 = vpop.permute.xlu0 %175
    %177 = vrot.lane.b32.xlu0 %v106, 112
    %v178 = vpop.permute.xlu0 %177
    %179 = vrot.lane.b32.xlu0 %v112, 112
    %v180 = vpop.permute.xlu0 %179
    %181 = vrot.lane.b32.xlu0 %v118, 112
    %v182 = vpop.permute.xlu0 %181
    %183 = vrot.lane.b32.xlu0 %v72, 112
    %v184 = vpop.permute.xlu0 %183
    %185 = vrot.lane.b32.xlu0 %v78, 112
    %v186 = vpop.permute.xlu0 %185
    %187 = vrot.lane.b32.xlu0 %v84, 112
    %v188 = vpop.permute.xlu0 %187
    %189 = vrot.lane.b32.xlu0 %v90, 112
    %v190 = vpop.permute.xlu0 %189
    %191 = vrot.lane.b32.xlu0 %v96, 112
    %v192 = vpop.permute.xlu0 %191
    %193 = vrot.lane.b32.xlu0 %v102, 112
    %v194 = vpop.permute.xlu0 %193
    %195 = vrot.lane.b32.xlu0 %v108, 112
    %v196 = vpop.permute.xlu0 %195
    %197 = vrot.lane.b32.xlu0 %v114, 112
    %v198 = vpop.permute.xlu0 %197
    %199 = vrot.lane.b32.xlu0 %v120, 112
    %v200 = vpop.permute.xlu0 %199
    %220 = vset.pattern.permute.xlu0 0
    %221 = vperm.xlu0 %220, %v34
    %v222 = vpop.permute.xlu0 %221
    %225 = vset.pattern.permute.xlu0 0
    %226 = vperm.xlu0 %225, %v35
    %v227 = vpop.permute.xlu0 %226
    %230 = vset.pattern.permute.xlu0 0
    %231 = vperm.xlu0 %230, %v36
    %v232 = vpop.permute.xlu0 %231
    %235 = vset.pattern.permute.xlu0 0
    %236 = vperm.xlu0 %235, %v37
    %v237 = vpop.permute.xlu0 %236
    %240 = vset.pattern.permute.xlu0 0
    %241 = vperm.xlu0 %240, %v38
    %v242 = vpop.permute.xlu0 %241
    %vm244 = vcmask 588800
    %v246 = vsel %vm244, %v25, 0
    %v249 = vsel %vm244, %v27, 0
    %v252 = vsel %vm244, %v29, 0
    %v255 = vsel %vm244, %v31, 0
    %v258 = vsel %vm244, %v33, 0
    %260 = vmatprep.subr.mxu0 0.0
    %261 = vmatpush1.msra.mxu0 %v71
    %262 = vmatprep.subr.mxu0 0.0
    %263 = vmatpush1.msra.mxu0 %v76
    %264 = vmatprep.subr.mxu0 0.0
    %265 = vmatpush1.msra.mxu0 %v82
    %266 = vmatprep.subr.mxu0 0.0
    %267 = vmatpush1.msra.mxu0 %v88
    %268 = vmatprep.subr.mxu0 0.0
    %269 = vmatpush1.msra.mxu0 %v94
    %270 = vmatprep.subr.mxu0 0.0
    %271 = vmatpush1.msra.mxu0 %v100
    %272 = vmatprep.subr.mxu0 0.0
    %273 = vmatpush1.msra.mxu0 %v106
    %274 = vmatprep.subr.mxu0 0.0
    %275 = vmatpush1.msra.mxu0 %v112
    %276 = vmatprep.subr.mxu0 0.0
    %277 = vmatpush1.msra.mxu0 %v118
    %278 = vmatprep.subr.mxu0 0.0
    %279 = vmatpush1.msra.mxu0 %v124
    %280 = vmatprep.subr.mxu0 0.0
    %281 = vmatpush1.msra.mxu0 %v130
    %282 = vmatprep.subr.mxu0 0.0
    %283 = vmatpush1.msra.mxu0 %v136
    %284 = vmatprep.subr.mxu0 0.0
    %285 = vmatpush1.msra.mxu0 %v142
    %286 = vmatprep.subr.mxu0 0.0
    %287 = vmatpush1.msra.mxu0 %v148
    %288 = vmatprep.subr.mxu0 0.0
    %289 = vmatpush1.msra.mxu0 %v154
    %290 = vmatprep.subr.mxu0 0.0
    %291 = vmatpush1.msra.mxu0 %v160
    %292 = vmatprep.subr.mxu0 0.0
    %293 = vmatpush1.msra.mxu0 %v166
    %294 = vmatprep.subr.mxu0 0.0
    %295 = vmatpush1.msra.mxu0 %v168
    %296 = vmatprep.subr.mxu0 0.0
    %297 = vmatpush1.msra.mxu0 %v170
    %298 = vmatprep.subr.mxu0 0.0
    %299 = vmatpush1.msra.mxu0 %v172
    %300 = vmatprep.subr.mxu0 0.0
    %301 = vmatpush1.msra.mxu0 %v174
    %302 = vmatprep.subr.mxu0 0.0
    %303 = vmatpush1.msra.mxu0 %v176
    %304 = vmatprep.subr.mxu0 0.0
    %305 = vmatpush1.msra.mxu0 %v178
    %306 = vmatprep.subr.mxu0 0.0
    %307 = vmatpush1.msra.mxu0 %v180
    %308 = vmatprep.subr.mxu0 0.0
    %309 = vmatpush1.msra.mxu0 %v182
    %310 = vmatprep.subr.mxu0 0.0
    %311 = vmatpush1.msra.mxu0 0.0
    %312 = vmatprep.subr.mxu0 0.0
    %313 = vmatpush1.msra.mxu0 0.0
    %314 = vmatprep.subr.mxu0 0.0
    %315 = vmatpush1.msra.mxu0 0.0
    %316 = vmatprep.subr.mxu0 0.0
    %317 = vmatpush1.msra.mxu0 0.0
    %318 = vmatprep.subr.mxu0 0.0
    %319 = vmatpush1.msra.mxu0 0.0
    %320 = vmatprep.subr.mxu0 0.0
    %321 = vmatpush1.msra.mxu0 0.0
    %322 = vmatprep.subr.mxu0 0.0
    %323 = vmatpush1.msra.mxu0 0.0
    %324 = vmatprep.mubr.f32.mxu0 %v246
    %325 = vmatmul.mubr.f32.gmra.mrb[0].mxu0 %v24
    %v326 = vpop.f32.mrb[0].mxu0
    %v327 = vadd.f32 %v222, %v326
    %v328 = vpop.f32.mrb[0].mxu0
    %329 = vmatprep.mubr.f32.mxu0 %v249
    %330 = vmatmul.mubr.f32.gmra.mrb[0].mxu0 %v26
    %v331 = vpop.f32.mrb[0].mxu0
    %v332 = vadd.f32 %v227, %v331
    %v333 = vpop.f32.mrb[0].mxu0
    %334 = vmatprep.mubr.f32.mxu0 %v252
    %335 = vmatmul.mubr.f32.gmra.mrb[0].mxu0 %v28
    %v336 = vpop.f32.mrb[0].mxu0
    %v337 = vadd.f32 %v232, %v336
    %v338 = vpop.f32.mrb[0].mxu0
    %339 = vmatprep.mubr.f32.mxu0 %v255
    %340 = vmatmul.mubr.f32.gmra.mrb[0].mxu0 %v30
    %v341 = vpop.f32.mrb[0].mxu0
    %v342 = vadd.f32 %v237, %v341
    %v343 = vpop.f32.mrb[0].mxu0
    %344 = vmatprep.mubr.f32.mxu0 %v258
    %345 = vmatmul.mubr.f32.gmra.mrb[0].mxu0 %v32
    %v346 = vpop.f32.mrb[0].mxu0
    %v347 = vadd.f32 %v242, %v346
    %v348 = vpop.f32.mrb[0].mxu0
    %349 = vdwg.mxu0
    %v350 = vmul.f32 %v327, %v327
    %v351 = vmul.f32 %v332, %v332
    %v352 = vmul.f32 %v337, %v337
    %v353 = vmul.f32 %v342, %v342
    %v354 = vmul.f32 %v347, %v347
    %vm355 = vcmask 785408
    %v357 = vsel %vm355, %v350, 0
    %v360 = vsel %vm355, %v351, 0
    %v363 = vsel %vm355, %v352, 0
    %v366 = vsel %vm355, %v353, 0
    %v369 = vsel %vm355, %v354, 0
    %371 = vmatprep.subr.mxu0 0.0
    %372 = vmatpush1.msra.mxu0 %v39
    %373 = vmatprep.subr.mxu0 0.0
    %374 = vmatpush1.msra.mxu0 %v40
    %375 = vmatprep.subr.mxu0 0.0
    %376 = vmatpush1.msra.mxu0 %v41
    %377 = vmatprep.subr.mxu0 0.0
    %378 = vmatpush1.msra.mxu0 %v42
    %379 = vmatprep.subr.mxu0 0.0
    %380 = vmatpush1.msra.mxu0 %v43
    %381 = vmatprep.subr.mxu0 0.0
    %382 = vmatpush1.msra.mxu0 %v44
    %383 = vmatprep.subr.mxu0 0.0
    %384 = vmatpush1.msra.mxu0 %v45
    %385 = vmatprep.subr.mxu0 0.0
    %386 = vmatpush1.msra.mxu0 %v46
    %387 = vmatprep.subr.mxu0 0.0
    %388 = vmatpush1.msra.mxu0 %v47
    %389 = vmatprep.subr.mxu0 0.0
    %390 = vmatpush1.msra.mxu0 %v48
    %391 = vmatprep.subr.mxu0 0.0
    %392 = vmatpush1.msra.mxu0 %v49
    %393 = vmatprep.subr.mxu0 0.0
    %394 = vmatpush1.msra.mxu0 %v50
    %395 = vmatprep.subr.mxu0 0.0
    %396 = vmatpush1.msra.mxu0 0.0
    %397 = vmatprep.subr.mxu0 0.0
    %398 = vmatpush1.msra.mxu0 0.0
    %399 = vmatprep.subr.mxu0 0.0
    %400 = vmatpush1.msra.mxu0 0.0
    %401 = vmatprep.subr.mxu0 0.0
    %402 = vmatpush1.msra.mxu0 0.0
    %403 = vmatprep.subr.mxu0 0.0
    %404 = vmatpush1.msra.mxu0 0.0
    %405 = vmatprep.subr.mxu0 0.0
    %406 = vmatpush1.msra.mxu0 0.0
    %407 = vmatprep.subr.mxu0 0.0
    %408 = vmatpush1.msra.mxu0 0.0
    %409 = vmatprep.subr.mxu0 0.0
    %410 = vmatpush1.msra.mxu0 0.0
    %411 = vmatprep.subr.mxu0 0.0
    %412 = vmatpush1.msra.mxu0 0.0
    %413 = vmatprep.subr.mxu0 0.0
    %414 = vmatpush1.msra.mxu0 0.0
    %415 = vmatprep.subr.mxu0 0.0
    %416 = vmatpush1.msra.mxu0 0.0
    %417 = vmatprep.subr.mxu0 0.0
    %418 = vmatpush1.msra.mxu0 0.0
    %419 = vmatprep.subr.mxu0 0.0
    %420 = vmatpush1.msra.mxu0 0.0
    %421 = vmatprep.subr.mxu0 0.0
    %422 = vmatpush1.msra.mxu0 0.0
    %423 = vmatprep.subr.mxu0 0.0
    %424 = vmatpush1.msra.mxu0 0.0
    %425 = vmatprep.subr.mxu0 0.0
    %426 = vmatpush1.msra.mxu0 0.0
    %427 = vmatprep.subr.mxu0 0.0
    %428 = vmatpush1.msra.mxu0 0.0
    %429 = vmatprep.subr.mxu0 0.0
    %430 = vmatpush1.msra.mxu0 0.0
    %431 = vmatprep.subr.mxu0 0.0
    %432 = vmatpush1.msra.mxu0 0.0
    %433 = vmatprep.subr.mxu0 0.0
    %434 = vmatpush1.msra.mxu0 0.0
    %435 = vmatprep.mubr.f32.mxu0 0.0
    %436 = vmatmul.mubr.f32.gmra.mrb[0].mxu0 %v357
    %v437 = vpop.f32.mrb[0].mxu0
    %v438 = vadd.f32 0.0, %v437
    %v439 = vpop.f32.mrb[0].mxu0
    %440 = vmatprep.mubr.f32.mxu0 0.0
    %441 = vmatmul.mubr.f32.gmra.mrb[0].mxu0 %v360
    %v442 = vpop.f32.mrb[0].mxu0
    %v443 = vadd.f32 0.0, %v442
    %v444 = vpop.f32.mrb[0].mxu0
    %445 = vmatprep.mubr.f32.mxu0 0.0
    %446 = vmatmul.mubr.f32.gmra.mrb[0].mxu0 %v363
    %v447 = vpop.f32.mrb[0].mxu0
    %v448 = vadd.f32 0.0, %v447
    %v449 = vpop.f32.mrb[0].mxu0
    %450 = vmatprep.mubr.f32.mxu0 0.0
    %451 = vmatmul.mubr.f32.gmra.mrb[0].mxu0 %v366
    %v452 = vpop.f32.mrb[0].mxu0
    %v453 = vadd.f32 0.0, %v452
    %v454 = vpop.f32.mrb[0].mxu0
    %455 = vmatprep.mubr.f32.mxu0 0.0
    %456 = vmatmul.mubr.f32.gmra.mrb[0].mxu0 %v369
    %v457 = vpop.f32.mrb[0].mxu0
    %v458 = vadd.f32 0.0, %v457
    %v459 = vpop.f32.mrb[0].mxu0
    %460 = vdwg.mxu0
    %v461 = vlog2.pop %v438
    %v462 = vmul.f32 %v461, 0.6931472
    %v463 = vlog2.pop %v443
    %v464 = vmul.f32 %v463, 0.6931472
    %v465 = vlog2.pop %v448
    %v466 = vmul.f32 %v465, 0.6931472
    %v467 = vlog2.pop %v453
    %v468 = vmul.f32 %v467, 0.6931472
    %v469 = vlog2.pop %v458
    %v470 = vmul.f32 %v469, 0.6931472
    %471 = vmatprep.subr.mxu0 0.0
    %472 = vmatpush1.msra.mxu0 %v72
    %473 = vmatprep.subr.mxu0 0.0
    %474 = vmatpush1.msra.mxu0 %v78
    %475 = vmatprep.subr.mxu0 0.0
    %476 = vmatpush1.msra.mxu0 %v84
    %477 = vmatprep.subr.mxu0 0.0
    %478 = vmatpush1.msra.mxu0 %v90
    %479 = vmatprep.subr.mxu0 0.0
    %480 = vmatpush1.msra.mxu0 %v96
    %481 = vmatprep.subr.mxu0 0.0
    %482 = vmatpush1.msra.mxu0 %v102
    %483 = vmatprep.subr.mxu0 0.0
    %484 = vmatpush1.msra.mxu0 %v108
    %485 = vmatprep.subr.mxu0 0.0
    %486 = vmatpush1.msra.mxu0 %v114
    %487 = vmatprep.subr.mxu0 0.0
    %488 = vmatpush1.msra.mxu0 %v120
    %489 = vmatprep.subr.mxu0 0.0
    %490 = vmatpush1.msra.mxu0 %v126
    %491 = vmatprep.subr.mxu0 0.0
    %492 = vmatpush1.msra.mxu0 %v132
    %493 = vmatprep.subr.mxu0 0.0
    %494 = vmatpush1.msra.mxu0 %v138
    %495 = vmatprep.subr.mxu0 0.0
    %496 = vmatpush1.msra.mxu0 %v144
    %497 = vmatprep.subr.mxu0 0.0
    %498 = vmatpush1.msra.mxu0 %v150
    %499 = vmatprep.subr.mxu0 0.0
    %500 = vmatpush1.msra.mxu0 %v156
    %501 = vmatprep.subr.mxu0 0.0
    %502 = vmatpush1.msra.mxu0 %v162
    %503 = vmatprep.subr.mxu0 0.0
    %504 = vmatpush1.msra.mxu0 %v184
    %505 = vmatprep.subr.mxu0 0.0
    %506 = vmatpush1.msra.mxu0 %v186
    %507 = vmatprep.subr.mxu0 0.0
    %508 = vmatpush1.msra.mxu0 %v188
    %509 = vmatprep.subr.mxu0 0.0
    %510 = vmatpush1.msra.mxu0 %v190
    %511 = vmatprep.subr.mxu0 0.0
    %512 = vmatpush1.msra.mxu0 %v192
    %513 = vmatprep.subr.mxu0 0.0
    %514 = vmatpush1.msra.mxu0 %v194
    %515 = vmatprep.subr.mxu0 0.0
    %516 = vmatpush1.msra.mxu0 %v196
    %517 = vmatprep.subr.mxu0 0.0
    %518 = vmatpush1.msra.mxu0 %v198
    %519 = vmatprep.subr.mxu0 0.0
    %520 = vmatpush1.msra.mxu0 %v200
    %521 = vmatprep.subr.mxu0 0.0
    %522 = vmatpush1.msra.mxu0 0.0
    %523 = vmatprep.subr.mxu0 0.0
    %524 = vmatpush1.msra.mxu0 0.0
    %525 = vmatprep.subr.mxu0 0.0
    %526 = vmatpush1.msra.mxu0 0.0
    %527 = vmatprep.subr.mxu0 0.0
    %528 = vmatpush1.msra.mxu0 0.0
    %529 = vmatprep.subr.mxu0 0.0
    %530 = vmatpush1.msra.mxu0 0.0
    %531 = vmatprep.subr.mxu0 0.0
    %532 = vmatpush1.msra.mxu0 0.0
    %533 = vmatprep.subr.mxu0 0.0
    %534 = vmatpush1.msra.mxu0 0.0
    %535 = vmatprep.mubr.f32.mxu0 %v246
    %536 = vmatmul.mubr.f32.gmra.mrb[0].mxu0 %v24
    %v537 = vpop.f32.mrb[0].mxu0
    %v538 = vadd.f32 %v222, %v537
    %v539 = vpop.f32.mrb[0].mxu0
    %540 = vmatprep.mubr.f32.mxu0 %v249
    %541 = vmatmul.mubr.f32.gmra.mrb[0].mxu0 %v26
    %v542 = vpop.f32.mrb[0].mxu0
    %v543 = vadd.f32 %v227, %v542
    %v544 = vpop.f32.mrb[0].mxu0
    %545 = vmatprep.mubr.f32.mxu0 %v252
    %546 = vmatmul.mubr.f32.gmra.mrb[0].mxu0 %v28
    %v547 = vpop.f32.mrb[0].mxu0
    %v548 = vadd.f32 %v232, %v547
    %v549 = vpop.f32.mrb[0].mxu0
    %550 = vmatprep.mubr.f32.mxu0 %v255
    %551 = vmatmul.mubr.f32.gmra.mrb[0].mxu0 %v30
    %v552 = vpop.f32.mrb[0].mxu0
    %v553 = vadd.f32 %v237, %v552
    %v554 = vpop.f32.mrb[0].mxu0
    %555 = vmatprep.mubr.f32.mxu0 %v258
    %556 = vmatmul.mubr.f32.gmra.mrb[0].mxu0 %v32
    %v557 = vpop.f32.mrb[0].mxu0
    %v558 = vadd.f32 %v242, %v557
    %v559 = vpop.f32.mrb[0].mxu0
    %560 = vdwg.mxu0
    %v561 = vmul.f32 %v538, %v538
    %v562 = vmul.f32 %v543, %v543
    %v563 = vmul.f32 %v548, %v548
    %v564 = vmul.f32 %v553, %v553
    %v565 = vmul.f32 %v558, %v558
    %v567 = vsel %vm355, %v561, 0
    %v570 = vsel %vm355, %v562, 0
    %v573 = vsel %vm355, %v563, 0
    %v576 = vsel %vm355, %v564, 0
    %v579 = vsel %vm355, %v565, 0
    %581 = vmatprep.subr.mxu0 0.0
    %582 = vmatpush1.msra.mxu0 %v39
    %583 = vmatprep.subr.mxu0 0.0
    %584 = vmatpush1.msra.mxu0 %v40
    %585 = vmatprep.subr.mxu0 0.0
    %586 = vmatpush1.msra.mxu0 %v41
    %587 = vmatprep.subr.mxu0 0.0
    %588 = vmatpush1.msra.mxu0 %v42
    %589 = vmatprep.subr.mxu0 0.0
    %590 = vmatpush1.msra.mxu0 %v43
    %591 = vmatprep.subr.mxu0 0.0
    %592 = vmatpush1.msra.mxu0 %v44
    %593 = vmatprep.subr.mxu0 0.0
    %594 = vmatpush1.msra.mxu0 %v45
    %595 = vmatprep.subr.mxu0 0.0
    %596 = vmatpush1.msra.mxu0 %v46
    %597 = vmatprep.subr.mxu0 0.0
    %598 = vmatpush1.msra.mxu0 %v47
    %599 = vmatprep.subr.mxu0 0.0
    %600 = vmatpush1.msra.mxu0 %v48
    %601 = vmatprep.subr.mxu0 0.0
    %602 = vmatpush1.msra.mxu0 %v49
    %603 = vmatprep.subr.mxu0 0.0
    %604 = vmatpush1.msra.mxu0 %v50
    %605 = vmatprep.subr.mxu0 0.0
    %606 = vmatpush1.msra.mxu0 0.0
    %607 = vmatprep.subr.mxu0 0.0
    %608 = vmatpush1.msra.mxu0 0.0
    %609 = vmatprep.subr.mxu0 0.0
    %610 = vmatpush1.msra.mxu0 0.0
    %611 = vmatprep.subr.mxu0 0.0
    %612 = vmatpush1.msra.mxu0 0.0
    %613 = vmatprep.subr.mxu0 0.0
    %614 = vmatpush1.msra.mxu0 0.0
    %615 = vmatprep.subr.mxu0 0.0
    %616 = vmatpush1.msra.mxu0 0.0
    %617 = vmatprep.subr.mxu0 0.0
    %618 = vmatpush1.msra.mxu0 0.0
    %619 = vmatprep.subr.mxu0 0.0
    %620 = vmatpush1.msra.mxu0 0.0
    %621 = vmatprep.subr.mxu0 0.0
    %622 = vmatpush1.msra.mxu0 0.0
    %623 = vmatprep.subr.mxu0 0.0
    %624 = vmatpush1.msra.mxu0 0.0
    %625 = vmatprep.subr.mxu0 0.0
    %626 = vmatpush1.msra.mxu0 0.0
    %627 = vmatprep.subr.mxu0 0.0
    %628 = vmatpush1.msra.mxu0 0.0
    %629 = vmatprep.subr.mxu0 0.0
    %630 = vmatpush1.msra.mxu0 0.0
    %631 = vmatprep.subr.mxu0 0.0
    %632 = vmatpush1.msra.mxu0 0.0
    %633 = vmatprep.subr.mxu0 0.0
    %634 = vmatpush1.msra.mxu0 0.0
    %635 = vmatprep.subr.mxu0 0.0
    %636 = vmatpush1.msra.mxu0 0.0
    %637 = vmatprep.subr.mxu0 0.0
    %638 = vmatpush1.msra.mxu0 0.0
    %639 = vmatprep.subr.mxu0 0.0
    %640 = vmatpush1.msra.mxu0 0.0
    %641 = vmatprep.subr.mxu0 0.0
    %642 = vmatpush1.msra.mxu0 0.0
    %643 = vmatprep.subr.mxu0 0.0
    %644 = vmatpush1.msra.mxu0 0.0
    %645 = vmatprep.mubr.f32.mxu0 0.0
    %646 = vmatmul.mubr.f32.gmra.mrb[0].mxu0 %v567
    %v647 = vpop.f32.mrb[0].mxu0
    %v648 = vadd.f32 0.0, %v647
    %v649 = vpop.f32.mrb[0].mxu0
    %650 = vmatprep.mubr.f32.mxu0 0.0
    %651 = vmatmul.mubr.f32.gmra.mrb[0].mxu0 %v570
    %v652 = vpop.f32.mrb[0].mxu0
    %v653 = vadd.f32 0.0, %v652
    %v654 = vpop.f32.mrb[0].mxu0
    %655 = vmatprep.mubr.f32.mxu0 0.0
    %656 = vmatmul.mubr.f32.gmra.mrb[0].mxu0 %v573
    %v657 = vpop.f32.mrb[0].mxu0
    %v658 = vadd.f32 0.0, %v657
    %v659 = vpop.f32.mrb[0].mxu0
    %660 = vmatprep.mubr.f32.mxu0 0.0
    %661 = vmatmul.mubr.f32.gmra.mrb[0].mxu0 %v576
    %v662 = vpop.f32.mrb[0].mxu0
    %v663 = vadd.f32 0.0, %v662
    %v664 = vpop.f32.mrb[0].mxu0
    %665 = vmatprep.mubr.f32.mxu0 0.0
    %666 = vmatmul.mubr.f32.gmra.mrb[0].mxu0 %v579
    %v667 = vpop.f32.mrb[0].mxu0
    %v668 = vadd.f32 0.0, %v667
    %v669 = vpop.f32.mrb[0].mxu0
    %670 = vdwg.mxu0
    %v671 = vlog2.pop %v648
    %v672 = vmul.f32 %v671, 0.6931472
    %v673 = vlog2.pop %v653
    %v674 = vmul.f32 %v673, 0.6931472
    %v675 = vlog2.pop %v658
    %v676 = vmul.f32 %v675, 0.6931472
    %v677 = vlog2.pop %v663
    %v678 = vmul.f32 %v677, 0.6931472
    %v679 = vlog2.pop %v668
    %v680 = vmul.f32 %v679, 0.6931472
    %v681 = vmul.f32 %v462, %v51
    %v682 = vmul.f32 %v464, %v52
    %v683 = vmul.f32 %v466, %v53
    %v684 = vmul.f32 %v468, %v54
    %v685 = vmul.f32 %v470, %v55
    %v686 = vmul.f32 %v672, %v51
    %v687 = vmul.f32 %v674, %v52
    %v688 = vmul.f32 %v676, %v53
    %v689 = vmul.f32 %v678, %v54
    %v690 = vmul.f32 %v680, %v55
    %vm691 = vcmask 15360
    %v692 = vsel %vm691, %v681, 0.0
    %693 = vadd.xlane.f32.xlu0 %v692
    %v694 = vpop.xlane.xlu0 %693
    %v695 = vsel %vm691, %v682, 0.0
    %696 = vadd.xlane.f32.xlu0 %v695
    %v697 = vpop.xlane.xlu0 %696
    %v698 = vsel %vm691, %v683, 0.0
    %699 = vadd.xlane.f32.xlu0 %v698
    %v700 = vpop.xlane.xlu0 %699
    %v701 = vsel %vm691, %v684, 0.0
    %702 = vadd.xlane.f32.xlu0 %v701
    %v703 = vpop.xlane.xlu0 %702
    %v704 = vsel %vm691, %v685, 0.0
    %705 = vadd.xlane.f32.xlu0 %v704
    %v706 = vpop.xlane.xlu0 %705
    %v707 = vsel %vm691, %v686, 0.0
    %708 = vadd.xlane.f32.xlu0 %v707
    %v709 = vpop.xlane.xlu0 %708
    %v710 = vsel %vm691, %v687, 0.0
    %711 = vadd.xlane.f32.xlu0 %v710
    %v712 = vpop.xlane.xlu0 %711
    %v713 = vsel %vm691, %v688, 0.0
    %714 = vadd.xlane.f32.xlu0 %v713
    %v715 = vpop.xlane.xlu0 %714
    %v716 = vsel %vm691, %v689, 0.0
    %717 = vadd.xlane.f32.xlu0 %v716
    %v718 = vpop.xlane.xlu0 %717
    %v719 = vsel %vm691, %v690, 0.0
    %720 = vadd.xlane.f32.xlu0 %v719
    %v721 = vpop.xlane.xlu0 %720
    %v732 = vlaneseq
    %v733 = vand.u32 %v732, 127
    %v734 = vlaneseq
    %v735 = vshrl.u32 %v734, 7
    %v736 = vsub.s32 %v733, %v735
    %v737 = vrot.slane %v694, %v736
    %v738 = vadd.s32 %v733, 4294967288
    %v739 = vlaneseq
    %v740 = vshrl.u32 %v739, 7
    %v741 = vsub.s32 %v738, %v740
    %v742 = vrot.slane %v697, %v741
    %vm743 = vcmask 130112
    %v744 = vsel %vm743, %v742, %v737
    %v745 = vadd.s32 %v733, 4294967280
    %v746 = vlaneseq
    %v747 = vshrl.u32 %v746, 7
    %v748 = vsub.s32 %v745, %v747
    %v749 = vrot.slane %v700, %v748
    %vm750 = vcmask 195712
    %v751 = vsel %vm750, %v749, %v744
    %v752 = vadd.s32 %v733, 4294967272
    %v753 = vlaneseq
    %v754 = vshrl.u32 %v753, 7
    %v755 = vsub.s32 %v752, %v754
    %v756 = vrot.slane %v703, %v755
    %vm757 = vcmask 261312
    %v758 = vsel %vm757, %v756, %v751
    %v759 = vadd.s32 %v733, 4294967264
    %v760 = vlaneseq
    %v761 = vshrl.u32 %v760, 7
    %v762 = vsub.s32 %v759, %v761
    %v763 = vrot.slane %v706, %v762
    %vm764 = vcmask 326912
    %v765 = vsel %vm764, %v763, %v758
    %v766 = vlaneseq
    %v767 = vshrl.u32 %v766, 7
    %v768 = vsub.s32 %v733, %v767
    %v769 = vrot.slane %v709, %v768
    %v770 = vlaneseq
    %v771 = vshrl.u32 %v770, 7
    %v772 = vsub.s32 %v738, %v771
    %v773 = vrot.slane %v712, %v772
    %v774 = vsel %vm743, %v773, %v769
    %v775 = vlaneseq
    %v776 = vshrl.u32 %v775, 7
    %v777 = vsub.s32 %v745, %v776
    %v778 = vrot.slane %v715, %v777
    %v779 = vsel %vm750, %v778, %v774
    %v780 = vlaneseq
    %v781 = vshrl.u32 %v780, 7
    %v782 = vsub.s32 %v752, %v781
    %v783 = vrot.slane %v718, %v782
    %v784 = vsel %vm757, %v783, %v779
    %v785 = vlaneseq
    %v786 = vshrl.u32 %v785, 7
    %v787 = vsub.s32 %v759, %v786
    %v788 = vrot.slane %v721, %v787
    %v789 = vsel %vm764, %v788, %v784
    %vm790 = vcmask 1041409
    %v791 = vsel %vm790, %v789, %v765
    %vm793 = vcmask 320512
    %v794 = vsel %vm793, %v791, 0.0
    %795 = vadd.xlane.f32.xlu0 %v794
    %v796 = vpop.xlane.xlu0 %795
    %v797 = vmul.f32 %v462, %v56
    %v798 = vmul.f32 %v464, %v57
    %v799 = vmul.f32 %v466, %v58
    %v800 = vmul.f32 %v468, %v59
    %v801 = vmul.f32 %v470, %v60
    %v802 = vmul.f32 %v672, %v56
    %v803 = vmul.f32 %v674, %v57
    %v804 = vmul.f32 %v676, %v58
    %v805 = vmul.f32 %v678, %v59
    %v806 = vmul.f32 %v680, %v60
    %v807 = vsel %vm691, %v797, 0.0
    %808 = vadd.xlane.f32.xlu0 %v807
    %v809 = vpop.xlane.xlu0 %808
    %v810 = vsel %vm691, %v798, 0.0
    %811 = vadd.xlane.f32.xlu0 %v810
    %v812 = vpop.xlane.xlu0 %811
    %v813 = vsel %vm691, %v799, 0.0
    %814 = vadd.xlane.f32.xlu0 %v813
    %v815 = vpop.xlane.xlu0 %814
    %v816 = vsel %vm691, %v800, 0.0
    %817 = vadd.xlane.f32.xlu0 %v816
    %v818 = vpop.xlane.xlu0 %817
    %v819 = vsel %vm691, %v801, 0.0
    %820 = vadd.xlane.f32.xlu0 %v819
    %v821 = vpop.xlane.xlu0 %820
    %v822 = vsel %vm691, %v802, 0.0
    %823 = vadd.xlane.f32.xlu0 %v822
    %v824 = vpop.xlane.xlu0 %823
    %v825 = vsel %vm691, %v803, 0.0
    %826 = vadd.xlane.f32.xlu0 %v825
    %v827 = vpop.xlane.xlu0 %826
    %v828 = vsel %vm691, %v804, 0.0
    %829 = vadd.xlane.f32.xlu0 %v828
    %v830 = vpop.xlane.xlu0 %829
    %v831 = vsel %vm691, %v805, 0.0
    %832 = vadd.xlane.f32.xlu0 %v831
    %v833 = vpop.xlane.xlu0 %832
    %v834 = vsel %vm691, %v806, 0.0
    %835 = vadd.xlane.f32.xlu0 %v834
    %v836 = vpop.xlane.xlu0 %835
    %v847 = vlaneseq
    %v848 = vshrl.u32 %v847, 7
    %v849 = vsub.s32 %v733, %v848
    %v850 = vrot.slane %v809, %v849
    %v851 = vlaneseq
    %v852 = vshrl.u32 %v851, 7
    %v853 = vsub.s32 %v738, %v852
    %v854 = vrot.slane %v812, %v853
    %v855 = vsel %vm743, %v854, %v850
    %v856 = vlaneseq
    %v857 = vshrl.u32 %v856, 7
    %v858 = vsub.s32 %v745, %v857
    %v859 = vrot.slane %v815, %v858
    %v860 = vsel %vm750, %v859, %v855
    %v861 = vlaneseq
    %v862 = vshrl.u32 %v861, 7
    %v863 = vsub.s32 %v752, %v862
    %v864 = vrot.slane %v818, %v863
    %v865 = vsel %vm757, %v864, %v860
    %v866 = vlaneseq
    %v867 = vshrl.u32 %v866, 7
    %v868 = vsub.s32 %v759, %v867
    %v869 = vrot.slane %v821, %v868
    %v870 = vsel %vm764, %v869, %v865
    %v871 = vlaneseq
    %v872 = vshrl.u32 %v871, 7
    %v873 = vsub.s32 %v733, %v872
    %v874 = vrot.slane %v824, %v873
    %v875 = vlaneseq
    %v876 = vshrl.u32 %v875, 7
    %v877 = vsub.s32 %v738, %v876
    %v878 = vrot.slane %v827, %v877
    %v879 = vsel %vm743, %v878, %v874
    %v880 = vlaneseq
    %v881 = vshrl.u32 %v880, 7
    %v882 = vsub.s32 %v745, %v881
    %v883 = vrot.slane %v830, %v882
    %v884 = vsel %vm750, %v883, %v879
    %v885 = vlaneseq
    %v886 = vshrl.u32 %v885, 7
    %v887 = vsub.s32 %v752, %v886
    %v888 = vrot.slane %v833, %v887
    %v889 = vsel %vm757, %v888, %v884
    %v890 = vlaneseq
    %v891 = vshrl.u32 %v890, 7
    %v892 = vsub.s32 %v759, %v891
    %v893 = vrot.slane %v836, %v892
    %v894 = vsel %vm764, %v893, %v889
    %v895 = vsel %vm790, %v894, %v870
    %v897 = vsel %vm793, %v895, 0.0
    %898 = vadd.xlane.f32.xlu0 %v897
    %v899 = vpop.xlane.xlu0 %898
    %v900 = vmul.f32 %v462, %v61
    %v901 = vmul.f32 %v464, %v62
    %v902 = vmul.f32 %v466, %v63
    %v903 = vmul.f32 %v468, %v64
    %v904 = vmul.f32 %v470, %v65
    %v905 = vmul.f32 %v672, %v61
    %v906 = vmul.f32 %v674, %v62
    %v907 = vmul.f32 %v676, %v63
    %v908 = vmul.f32 %v678, %v64
    %v909 = vmul.f32 %v680, %v65
    %v910 = vsel %vm691, %v900, 0.0
    %911 = vadd.xlane.f32.xlu0 %v910
    %v912 = vpop.xlane.xlu0 %911
    %v913 = vsel %vm691, %v901, 0.0
    %914 = vadd.xlane.f32.xlu0 %v913
    %v915 = vpop.xlane.xlu0 %914
    %v916 = vsel %vm691, %v902, 0.0
    %917 = vadd.xlane.f32.xlu0 %v916
    %v918 = vpop.xlane.xlu0 %917
    %v919 = vsel %vm691, %v903, 0.0
    %920 = vadd.xlane.f32.xlu0 %v919
    %v921 = vpop.xlane.xlu0 %920
    %v922 = vsel %vm691, %v904, 0.0
    %923 = vadd.xlane.f32.xlu0 %v922
    %v924 = vpop.xlane.xlu0 %923
    %v925 = vsel %vm691, %v905, 0.0
    %926 = vadd.xlane.f32.xlu0 %v925
    %v927 = vpop.xlane.xlu0 %926
    %v928 = vsel %vm691, %v906, 0.0
    %929 = vadd.xlane.f32.xlu0 %v928
    %v930 = vpop.xlane.xlu0 %929
    %v931 = vsel %vm691, %v907, 0.0
    %932 = vadd.xlane.f32.xlu0 %v931
    %v933 = vpop.xlane.xlu0 %932
    %v934 = vsel %vm691, %v908, 0.0
    %935 = vadd.xlane.f32.xlu0 %v934
    %v936 = vpop.xlane.xlu0 %935
    %v937 = vsel %vm691, %v909, 0.0
    %938 = vadd.xlane.f32.xlu0 %v937
    %v939 = vpop.xlane.xlu0 %938
    %v950 = vlaneseq
    %v951 = vshrl.u32 %v950, 7
    %v952 = vsub.s32 %v733, %v951
    %v953 = vrot.slane %v912, %v952
    %v954 = vlaneseq
    %v955 = vshrl.u32 %v954, 7
    %v956 = vsub.s32 %v738, %v955
    %v957 = vrot.slane %v915, %v956
    %v958 = vsel %vm743, %v957, %v953
    %v959 = vlaneseq
    %v960 = vshrl.u32 %v959, 7
    %v961 = vsub.s32 %v745, %v960
    %v962 = vrot.slane %v918, %v961
    %v963 = vsel %vm750, %v962, %v958
    %v964 = vlaneseq
    %v965 = vshrl.u32 %v964, 7
    %v966 = vsub.s32 %v752, %v965
    %v967 = vrot.slane %v921, %v966
    %v968 = vsel %vm757, %v967, %v963
    %v969 = vlaneseq
    %v970 = vshrl.u32 %v969, 7
    %v971 = vsub.s32 %v759, %v970
    %v972 = vrot.slane %v924, %v971
    %v973 = vsel %vm764, %v972, %v968
    %v974 = vlaneseq
    %v975 = vshrl.u32 %v974, 7
    %v976 = vsub.s32 %v733, %v975
    %v977 = vrot.slane %v927, %v976
    %v978 = vlaneseq
    %v979 = vshrl.u32 %v978, 7
    %v980 = vsub.s32 %v738, %v979
    %v981 = vrot.slane %v930, %v980
    %v982 = vsel %vm743, %v981, %v977
    %v983 = vlaneseq
    %v984 = vshrl.u32 %v983, 7
    %v985 = vsub.s32 %v745, %v984
    %v986 = vrot.slane %v933, %v985
    %v987 = vsel %vm750, %v986, %v982
    %v988 = vlaneseq
    %v989 = vshrl.u32 %v988, 7
    %v990 = vsub.s32 %v752, %v989
    %v991 = vrot.slane %v936, %v990
    %v992 = vsel %vm757, %v991, %v987
    %v993 = vlaneseq
    %v994 = vshrl.u32 %v993, 7
    %v995 = vsub.s32 %v759, %v994
    %v996 = vrot.slane %v939, %v995
    %v997 = vsel %vm764, %v996, %v992
    %v998 = vsel %vm790, %v997, %v973
    %v1000 = vsel %vm793, %v998, 0.0
    %1001 = vadd.xlane.f32.xlu0 %v1000
    %v1002 = vpop.xlane.xlu0 %1001
    %v1003 = vmul.f32 %v462, %v66
    %v1004 = vmul.f32 %v464, %v67
    %v1005 = vmul.f32 %v466, %v68
    %v1006 = vmul.f32 %v468, %v69
    %v1007 = vmul.f32 %v470, %v70
    %v1008 = vmul.f32 %v672, %v66
    %v1009 = vmul.f32 %v674, %v67
    %v1010 = vmul.f32 %v676, %v68
    %v1011 = vmul.f32 %v678, %v69
    %v1012 = vmul.f32 %v680, %v70
    %v1013 = vsel %vm691, %v1003, 0.0
    %1014 = vadd.xlane.f32.xlu0 %v1013
    %v1015 = vpop.xlane.xlu0 %1014
    %v1016 = vsel %vm691, %v1004, 0.0
    %1017 = vadd.xlane.f32.xlu0 %v1016
    %v1018 = vpop.xlane.xlu0 %1017
    %v1019 = vsel %vm691, %v1005, 0.0
    %1020 = vadd.xlane.f32.xlu0 %v1019
    %v1021 = vpop.xlane.xlu0 %1020
    %v1022 = vsel %vm691, %v1006, 0.0
    %1023 = vadd.xlane.f32.xlu0 %v1022
    %v1024 = vpop.xlane.xlu0 %1023
    %v1025 = vsel %vm691, %v1007, 0.0
    %1026 = vadd.xlane.f32.xlu0 %v1025
    %v1027 = vpop.xlane.xlu0 %1026
    %v1028 = vsel %vm691, %v1008, 0.0
    %1029 = vadd.xlane.f32.xlu0 %v1028
    %v1030 = vpop.xlane.xlu0 %1029
    %v1031 = vsel %vm691, %v1009, 0.0
    %1032 = vadd.xlane.f32.xlu0 %v1031
    %v1033 = vpop.xlane.xlu0 %1032
    %v1034 = vsel %vm691, %v1010, 0.0
    %1035 = vadd.xlane.f32.xlu0 %v1034
    %v1036 = vpop.xlane.xlu0 %1035
    %v1037 = vsel %vm691, %v1011, 0.0
    %1038 = vadd.xlane.f32.xlu0 %v1037
    %v1039 = vpop.xlane.xlu0 %1038
    %v1040 = vsel %vm691, %v1012, 0.0
    %1041 = vadd.xlane.f32.xlu0 %v1040
    %v1042 = vpop.xlane.xlu0 %1041
    %v1053 = vlaneseq
    %v1054 = vshrl.u32 %v1053, 7
    %v1055 = vsub.s32 %v733, %v1054
    %v1056 = vrot.slane %v1015, %v1055
    %v1057 = vlaneseq
    %v1058 = vshrl.u32 %v1057, 7
    %v1059 = vsub.s32 %v738, %v1058
    %v1060 = vrot.slane %v1018, %v1059
    %v1061 = vsel %vm743, %v1060, %v1056
    %v1062 = vlaneseq
    %v1063 = vshrl.u32 %v1062, 7
    %v1064 = vsub.s32 %v745, %v1063
    %v1065 = vrot.slane %v1021, %v1064
    %v1066 = vsel %vm750, %v1065, %v1061
    %v1067 = vlaneseq
    %v1068 = vshrl.u32 %v1067, 7
    %v1069 = vsub.s32 %v752, %v1068
    %v1070 = vrot.slane %v1024, %v1069
    %v1071 = vsel %vm757, %v1070, %v1066
    %v1072 = vlaneseq
    %v1073 = vshrl.u32 %v1072, 7
    %v1074 = vsub.s32 %v759, %v1073
    %v1075 = vrot.slane %v1027, %v1074
    %v1076 = vsel %vm764, %v1075, %v1071
    %v1077 = vlaneseq
    %v1078 = vshrl.u32 %v1077, 7
    %v1079 = vsub.s32 %v733, %v1078
    %v1080 = vrot.slane %v1030, %v1079
    %v1081 = vlaneseq
    %v1082 = vshrl.u32 %v1081, 7
    %v1083 = vsub.s32 %v738, %v1082
    %v1084 = vrot.slane %v1033, %v1083
    %v1085 = vsel %vm743, %v1084, %v1080
    %v1086 = vlaneseq
    %v1087 = vshrl.u32 %v1086, 7
    %v1088 = vsub.s32 %v745, %v1087
    %v1089 = vrot.slane %v1036, %v1088
    %v1090 = vsel %vm750, %v1089, %v1085
    %v1091 = vlaneseq
    %v1092 = vshrl.u32 %v1091, 7
    %v1093 = vsub.s32 %v752, %v1092
    %v1094 = vrot.slane %v1039, %v1093
    %v1095 = vsel %vm757, %v1094, %v1090
    %v1096 = vlaneseq
    %v1097 = vshrl.u32 %v1096, 7
    %v1098 = vsub.s32 %v759, %v1097
    %v1099 = vrot.slane %v1042, %v1098
    %v1100 = vsel %vm764, %v1099, %v1095
    %v1101 = vsel %vm790, %v1100, %v1076
    %v1103 = vsel %vm793, %v1101, 0.0
    %1104 = vadd.xlane.f32.xlu0 %v1103
    %v1105 = vpop.xlane.xlu0 %1104
    %vm1106 = vcmask 7168
    %v1107 = vsel %vm1106, %v796, %v899
    %v1108 = vsel %vm691, %v1107, %v1002
    %vm1109 = vcmask 23552
    %v1110 = vsel %vm1109, %v1108, %v1105
    %v1111 = vld [vmem:[%s5] sm:$0x1]
    %v1113 = vlaneseq
    %v1114 = vshrl.u32 %v1113, 7
    %v1115 = vsub.s32 0, %v1114
    %v1116 = vrot.slane %v1111, %v1115
    %v1118 = vadd.f32 %v1110, %v1116
    %vm1119 = vcmask 25600
    %1120 = vst.msk [vmem:[#allocation2] sm:$0x3] %vm1119, %v1118
    // Predicated region
    $region26: #{tpu_custom_call.1} parent=1 // pred_check
      _
    $region27: #{tpu_custom_call.1} parent=1 // pred_check_branch
      %1122 = sbr.rel (0) target = $region29
    $region28: #{tpu_custom_call.1} parent=1 // pred_region
      %s1124 = ssub.s32 32, 32
      %1125 = vsyncadd [#allocation3], %s1124
      %s1127 = sshll.u32 [#allocation2], 4
      %s1128 = int_to_ptr.vmem [resolvable:$true] %s1127
      %1130 = dma.vmem_to_hbm [thread:$0]  %s1128, 32, %s6, [#allocation3]
    $region29: #{tpu_custom_call.1} parent=1 // pred_fallthru
      _
    // Predicated region
    $region30: #{tpu_custom_call.1} parent=1 // pred_check
      _
    $region31: #{tpu_custom_call.1} parent=1 // pred_check_branch
      %1132 = sbr.rel (0) target = $region33
    $region32: #{tpu_custom_call.1} parent=1 // pred_region
      %1133 = dma.done [#allocation3], 32
    $region33: #{tpu_custom_call.1} parent=1 // pred_fallthru
      _
    %1134 = vsyncpa [#allocation3], 1

</llo_original>
